<compile_context>
chip_gen: v7x
topology: tpu7x:2x2x1
jax: 0.10.0
libtpu: 0.0.40
codegen_flags: <defaults>
</compile_context>

<pallas_src>
import math

import jax
import jax.numpy as jnp
from jax.experimental import pallas as pl
from jax.experimental.pallas import tpu as pltpu


def _attention_kernel(k_ref, q_ref, wk_ref, bk_ref, wq_ref, bq_ref,
                      wp_ref, bp_ref, out_ref, score_ref, kx_ref):
    # K projection: computed once per batch tile (qi == 0), cached in VMEM
    # scratch and reused by every q tile of this batch tile.
    @pl.when(pl.program_id(1) == 0)
    def _():
        kx = jnp.einsum("ble,eh->blh", k_ref[...], wk_ref[...],
                        preferred_element_type=jnp.float32) + bk_ref[...]
        kx_ref[...] = kx.astype(jnp.bfloat16)

    kx = kx_ref[...]                                          # (bt, k_len, H) bf16

    # Q projection for this q tile (bf16 operands, f32 accumulate/bias).
    qx = jnp.einsum("ble,eh->blh", q_ref[...], wq_ref[...],
                    preferred_element_type=jnp.float32) + bq_ref[...]
    qx = qx.astype(jnp.bfloat16)                              # (bt, tq, H)

    # dot_product score: contract hidden dims directly (no explicit kx.T).
    score = jnp.einsum("bqh,bkh->bqk", qx, kx,
                       preferred_element_type=jnp.float32)    # (bt, tq, k_len)

    # Numerically stable softmax over k_len. Exact division so the returned
    # probabilities sum to 1 (division lives on the EUP — free here).
    m = jnp.max(score, axis=-1, keepdims=True)
    e = jnp.exp(score - m)
    attn = e / jnp.sum(e, axis=-1, keepdims=True)

    # Weighted sum of values (kx doubles as values, as in the reference),
    # then the output projection, all as batched einsums on the 3-D blocks.
    ctx = jnp.einsum("bqk,bkh->bqh", attn.astype(jnp.bfloat16), kx,
                     preferred_element_type=jnp.float32)
    out = jnp.einsum("bqh,ho->bqo", ctx.astype(jnp.bfloat16), wp_ref[...],
                     preferred_element_type=jnp.float32) + bp_ref[...]

    out_ref[...] = out.astype(out_ref.dtype)
    score_ref[...] = attn.astype(score_ref.dtype)


def _vmem_limit_bytes():
    """Scoped VMEM limit: ~3/4 of physical (≈96 MiB on v5e/v6e, ≈48 MiB on v7x)."""
    cap = 64 * 1024 * 1024
    try:
        info = pltpu.get_tpu_info()
        cap = int(getattr(info, "vmem_capacity_bytes", cap)) or cap
    except Exception:
        pass
    return min(100 * 1024 * 1024, (cap * 3) // 4)


def _pick_tiles(B, k_len, q_len, E, hidden, out_dim, vmem_limit):
    """k_len- and VMEM-aware (bt, tq, padded_q_len)."""
    budget = int(vmem_limit * 0.55)  # headroom for weights & compiler scratch

    # Bytes live in VMEM per (batch, q) row each step:
    #   q in (bf16, 2x buffered), out (f32, 2x), score out (f32, 2x),
    #   ~4 f32 score/exp/attn temporaries, attn bf16, qx/ctx in f32 + bf16.
    per_row = (2 * E * 2 + 2 * out_dim * 4 + 2 * k_len * 4
               + 4 * k_len * 4 + k_len * 2 + hidden * 12)
    rows_budget = max(8, budget // per_row)

    # Batch tile: bounded by the K-side cost (k in bf16 2x buffered + kx
    # scratch bf16) and by leaving room for at least 8 q rows per batch.
    per_b = k_len * (2 * E * 2 + hidden * 2)
    bt = 1
    for d in range(1, B + 1):
        if B % d == 0 and d * per_b <= budget // 4 and d * 8 <= rows_budget:
            bt = d

    # q tile: target 512-1024 rows/step (amortizes ~0.35us step overhead),
    # capped by the VMEM row budget; multiple of 16 (bf16 sublanes) or full.
    target = 1024 if vmem_limit >= 64 * 1024 * 1024 else 512
    tq_cap = max(8, min(rows_budget, target) // bt)
    if q_len <= tq_cap:
        return bt, q_len, q_len           # full-dim block, no padding needed
    tq = max(16, (tq_cap // 16) * 16)
    q_pad = ((q_len + tq - 1) // tq) * tq
    return bt, tq, q_pad


@jax.jit
def attention_forward(k, q, wk, bk, wq, bq, wp, bp):
    """k: (B, k_len, E), q: (B, q_len, E). Returns (output, score)."""
    if k.ndim == 2:
        k = k[:, None, :]
    if q.ndim == 2:
        q = q[:, None, :]

    B, k_len, E = k.shape
    q_len = q.shape[1]
    hidden = wk.shape[1]
    out_dim = wp.shape[1]

    vmem_limit = _vmem_limit_bytes()
    bt, tq, q_pad = _pick_tiles(B, k_len, q_len, E, hidden, out_dim, vmem_limit)

    # bf16 matmul operands (MXU bf16 peak, half the HBM/VMEM traffic);
    # biases, accumulation and outputs stay f32.
    k_bf = k.astype(jnp.bfloat16)
    q_bf = q.astype(jnp.bfloat16)
    if q_pad > q_len:
        q_bf = jnp.pad(q_bf, ((0, 0), (0, q_pad - q_len), (0, 0)))
    wk_bf = wk.astype(jnp.bfloat16)
    wq_bf = wq.astype(jnp.bfloat16)
    wp_bf = wp.astype(jnp.bfloat16)

    grid = (B // bt, q_pad // tq)

    out, score = pl.pallas_call(
        _attention_kernel,
        out_shape=(
            jax.ShapeDtypeStruct((B, q_pad, out_dim), jnp.float32),
            jax.ShapeDtypeStruct((B, q_pad, k_len), jnp.float32),
        ),
        grid_spec=pltpu.PrefetchScalarGridSpec(
            num_scalar_prefetch=0,
            grid=grid,
            in_specs=[
                pl.BlockSpec((bt, k_len, E), lambda b, qi: (b, 0, 0)),
                pl.BlockSpec((bt, tq, E), lambda b, qi: (b, qi, 0)),
                pl.BlockSpec((E, hidden), lambda b, qi: (0, 0)),
                pl.BlockSpec((1, hidden), lambda b, qi: (0, 0)),
                pl.BlockSpec((E, hidden), lambda b, qi: (0, 0)),
                pl.BlockSpec((1, hidden), lambda b, qi: (0, 0)),
                pl.BlockSpec((hidden, out_dim), lambda b, qi: (0, 0)),
                pl.BlockSpec((1, out_dim), lambda b, qi: (0, 0)),
            ],
            out_specs=[
                pl.BlockSpec((bt, tq, out_dim), lambda b, qi: (b, qi, 0)),
                pl.BlockSpec((bt, tq, k_len), lambda b, qi: (b, qi, 0)),
            ],
            scratch_shapes=[pltpu.VMEM((bt, k_len, hidden), jnp.bfloat16)],
        ),
        compiler_params=pltpu.CompilerParams(
            # b tiles are independent (megacore-shardable); the qi axis must
            # iterate in order because the kx scratch is reused across it.
            dimension_semantics=("parallel", "arbitrary"),
            vmem_limit_bytes=vmem_limit,
        ),
    )(k_bf, q_bf, wk_bf, bk, wq_bf, bq, wp_bf, bp)

    if q_pad > q_len:
        out = out[:, :q_len]
        score = score[:, :q_len]
    return out, score


def _reference(k, q, wk, bk, wq, bq, wp, bp):
    kx = jnp.einsum("ble,eh->blh", k, wk) + bk
    qx = jnp.einsum("ble,eh->blh", q, wq) + bq
    score = jnp.einsum("bqh,bkh->bqk", qx, kx)
    attn = jax.nn.softmax(score, axis=-1)
    ctx = jnp.einsum("bqk,bkh->bqh", attn, kx)
    out = jnp.einsum("bqh,ho->bqo", ctx, wp) + bp
    return out, attn


if __name__ == "__main__":
    # Small, module-consistent shapes:
    #   embed_dim = 32, n_head = 1 -> hidden_dim = 32, out_dim = 32
    B, k_len, q_len, E = 2, 8, 8, 32
    hidden, out_dim = E, E

    key = jax.random.PRNGKey(0)
    ks = jax.random.split(key, 8)

    k_in = jax.random.normal(ks[0], (B, k_len, E), dtype=jnp.float32)
    q_in = jax.random.normal(ks[1], (B, q_len, E), dtype=jnp.float32)

    # nn.Linear-style deterministic init: U(-1/sqrt(fan_in), 1/sqrt(fan_in)).
    lim_e = 1.0 / math.sqrt(E)
    lim_h = 1.0 / math.sqrt(hidden)
    wk = jax.random.uniform(ks[2], (E, hidden), jnp.float32, -lim_e, lim_e)
    bk = jax.random.uniform(ks[3], (1, hidden), jnp.float32, -lim_e, lim_e)
    wq = jax.random.uniform(ks[4], (E, hidden), jnp.float32, -lim_e, lim_e)
    bq = jax.random.uniform(ks[5], (1, hidden), jnp.float32, -lim_e, lim_e)
    wp = jax.random.uniform(ks[6], (hidden, out_dim), jnp.float32, -lim_h, lim_h)
    bp = jax.random.uniform(ks[7], (1, out_dim), jnp.float32, -lim_h, lim_h)

    out, score = attention_forward(k_in, q_in, wk, bk, wq, bq, wp, bp)
    out = jax.block_until_ready(out)
    score = jax.block_until_ready(score)

    ref_out, ref_score = _reference(k_in, q_in, wk, bk, wq, bq, wp, bp)
    assert out.shape == (B, q_len, out_dim)
    assert score.shape == (B, q_len, k_len)
    # Tolerances loosened vs. the f32 reference because the kernel uses bf16
    # matmul operands (with f32 accumulation).
    assert jnp.allclose(out, ref_out, atol=5e-2, rtol=5e-2)
    assert jnp.allclose(score, ref_score, atol=2e-2, rtol=2e-2)

    print("KERNEL_OK")
</pallas_src>

<mosaic_0001>
module attributes {stable_mosaic.version = 11 : i64} {
  func.func @_attention_kernel(%arg0: i32, %arg1: i32, %arg2: memref<2x8x32xbf16, #tpu.memory_space<vmem>>, %arg3: memref<2x8x32xbf16, #tpu.memory_space<vmem>>, %arg4: memref<32x32xbf16, #tpu.memory_space<vmem>>, %arg5: memref<1x32xf32, #tpu.memory_space<vmem>>, %arg6: memref<32x32xbf16, #tpu.memory_space<vmem>>, %arg7: memref<1x32xf32, #tpu.memory_space<vmem>>, %arg8: memref<32x32xbf16, #tpu.memory_space<vmem>>, %arg9: memref<1x32xf32, #tpu.memory_space<vmem>>, %arg10: memref<2x8x32xf32, #tpu.memory_space<vmem>>, %arg11: memref<2x8x8xf32, #tpu.memory_space<vmem>>, %arg12: memref<2x8x32xbf16, #tpu.memory_space<vmem>>) attributes {dimension_semantics = [#tpu.dimension_semantics<parallel>, #tpu.dimension_semantics<arbitrary>], iteration_bounds = array<i64: 1, 1>, scalar_prefetch = 0 : i64, scratch_operands = 1 : i64, tpu.core_type = #tpu.core_type<tc>, window_params = [{transform_indices = @transform_0, window_bounds = array<i64: 2, 8, 32>}, {transform_indices = @transform_1, window_bounds = array<i64: 2, 8, 32>}, {pipeline_mode = #tpu.pipeline_mode<synchronous>, transform_indices = @transform_2, window_bounds = array<i64: 32, 32>}, {pipeline_mode = #tpu.pipeline_mode<synchronous>, transform_indices = @transform_3, window_bounds = array<i64: 1, 32>}, {pipeline_mode = #tpu.pipeline_mode<synchronous>, transform_indices = @transform_4, window_bounds = array<i64: 32, 32>}, {pipeline_mode = #tpu.pipeline_mode<synchronous>, transform_indices = @transform_5, window_bounds = array<i64: 1, 32>}, {pipeline_mode = #tpu.pipeline_mode<synchronous>, transform_indices = @transform_6, window_bounds = array<i64: 32, 32>}, {pipeline_mode = #tpu.pipeline_mode<synchronous>, transform_indices = @transform_7, window_bounds = array<i64: 1, 32>}, {transform_indices = @transform_8, window_bounds = array<i64: 2, 8, 32>}, {transform_indices = @transform_9, window_bounds = array<i64: 2, 8, 8>}]} {
    %c0_i32 = arith.constant 0 : i32
    %0 = arith.cmpi eq, %arg1, %c0_i32 : i32
    %1 = arith.extui %0 : i1 to i32
    %c0_i32_0 = arith.constant 0 : i32
    %2 = arith.cmpi ne, %1, %c0_i32_0 : i32
    scf.if %2 {
      %c0_25 = arith.constant 0 : index
      %c0_26 = arith.constant 0 : index
      %c0_27 = arith.constant 0 : index
      %33 = vector.load %arg2[%c0_25, %c0_26, %c0_27] : memref<2x8x32xbf16, #tpu.memory_space<vmem>>, vector<2x8x32xbf16>
      %c0_28 = arith.constant 0 : index
      %c0_29 = arith.constant 0 : index
      %34 = vector.load %arg4[%c0_28, %c0_29] : memref<32x32xbf16, #tpu.memory_space<vmem>>, vector<32x32xbf16>
      "tpu.trace_start"() <{level = 10 : i32, message = "ble,eh->blh"}> : () -> ()
      %cst_30 = arith.constant dense<0.000000e+00> : vector<2x8x32xf32>
      %35 = tpu.matmul %33, %34, %cst_30 {dimension_numbers = #tpu.dot_dimension_numbers<[2], [0], [0, 1], [1], [0, 0, 0, 1, 1, 1], [], []>} : vector<2x8x32xbf16>, vector<32x32xbf16>, vector<2x8x32xf32> -> vector<2x8x32xf32>
      "tpu.trace_stop"() : () -> ()
      %c0_31 = arith.constant 0 : index
      %c0_32 = arith.constant 0 : index
      %36 = vector.load %arg5[%c0_31, %c0_32] : memref<1x32xf32, #tpu.memory_space<vmem>>, vector<1x32xf32>
      %37 = vector.shape_cast %36 : vector<1x32xf32> to vector<1x1x32xf32>
      %38 = vector.broadcast %37 : vector<1x1x32xf32> to vector<2x8x32xf32>
      %39 = arith.addf %35, %38 : vector<2x8x32xf32>
      %40 = arith.truncf %39 : vector<2x8x32xf32> to vector<2x8x32xbf16>
      %c0_33 = arith.constant 0 : index
      %c0_34 = arith.constant 0 : index
      %c0_35 = arith.constant 0 : index
      %41 = vector.load %arg12[%c0_33, %c0_34, %c0_35] : memref<2x8x32xbf16, #tpu.memory_space<vmem>>, vector<2x8x32xbf16>
      tpu.vector_store %arg12[%c0_33, %c0_34, %c0_35], %40 {strides = array<i32>} : memref<2x8x32xbf16, #tpu.memory_space<vmem>>, vector<2x8x32xbf16>,
    } else {
    }
    %c0 = arith.constant 0 : index
    %c0_1 = arith.constant 0 : index
    %c0_2 = arith.constant 0 : index
    %3 = vector.load %arg12[%c0, %c0_1, %c0_2] : memref<2x8x32xbf16, #tpu.memory_space<vmem>>, vector<2x8x32xbf16>
    %c0_3 = arith.constant 0 : index
    %c0_4 = arith.constant 0 : index
    %c0_5 = arith.constant 0 : index
    %4 = vector.load %arg3[%c0_3, %c0_4, %c0_5] : memref<2x8x32xbf16, #tpu.memory_space<vmem>>, vector<2x8x32xbf16>
    %c0_6 = arith.constant 0 : index
    %c0_7 = arith.constant 0 : index
    %5 = vector.load %arg6[%c0_6, %c0_7] : memref<32x32xbf16, #tpu.memory_space<vmem>>, vector<32x32xbf16>
    "tpu.trace_start"() <{level = 10 : i32, message = "ble,eh->blh"}> : () -> ()
    %cst = arith.constant dense<0.000000e+00> : vector<2x8x32xf32>
    %6 = tpu.matmul %4, %5, %cst {dimension_numbers = #tpu.dot_dimension_numbers<[2], [0], [0, 1], [1], [0, 0, 0, 1, 1, 1], [], []>} : vector<2x8x32xbf16>, vector<32x32xbf16>, vector<2x8x32xf32> -> vector<2x8x32xf32>
    "tpu.trace_stop"() : () -> ()
    %c0_8 = arith.constant 0 : index
    %c0_9 = arith.constant 0 : index
    %7 = vector.load %arg7[%c0_8, %c0_9] : memref<1x32xf32, #tpu.memory_space<vmem>>, vector<1x32xf32>
    %8 = vector.shape_cast %7 : vector<1x32xf32> to vector<1x1x32xf32>
    %9 = vector.broadcast %8 : vector<1x1x32xf32> to vector<2x8x32xf32>
    %10 = arith.addf %6, %9 : vector<2x8x32xf32>
    %11 = arith.truncf %10 : vector<2x8x32xf32> to vector<2x8x32xbf16>
    "tpu.trace_start"() <{level = 10 : i32, message = "bqh,bkh->bqk"}> : () -> ()
    %cst_10 = arith.constant dense<0.000000e+00> : vector<2x8x8xf32>
    %12 = tpu.matmul %11, %3, %cst_10 {dimension_numbers = #tpu.dot_dimension_numbers<[2], [2], [1], [1], [0, 0, 0, 1, 1, 1], [0], [0]>} : vector<2x8x32xbf16>, vector<2x8x32xbf16>, vector<2x8x8xf32> -> vector<2x8x8xf32>
    "tpu.trace_stop"() : () -> ()
    %cst_11 = arith.constant dense<0xFF800000> : vector<2x8xf32>
    %13 = vector.multi_reduction <maximumf>, %12, %cst_11 [2] : vector<2x8x8xf32> to vector<2x8xf32>
    %14 = vector.shape_cast %13 : vector<2x8xf32> to vector<2x8x1xf32>
    %15 = vector.broadcast %14 : vector<2x8x1xf32> to vector<2x8x8xf32>
    %16 = arith.subf %12, %15 : vector<2x8x8xf32>
    %17 = math.exp %16 : vector<2x8x8xf32>
    %cst_12 = arith.constant dense<0.000000e+00> : vector<2x8xf32>
    %18 = vector.multi_reduction <add>, %17, %cst_12 [2] : vector<2x8x8xf32> to vector<2x8xf32>
    %19 = vector.shape_cast %18 : vector<2x8xf32> to vector<2x8x1xf32>
    %20 = vector.broadcast %19 : vector<2x8x1xf32> to vector<2x8x8xf32>
    %21 = arith.divf %17, %20 : vector<2x8x8xf32>
    %22 = arith.truncf %21 : vector<2x8x8xf32> to vector<2x8x8xbf16>
    "tpu.trace_start"() <{level = 10 : i32, message = "bqk,bkh->bqh"}> : () -> ()
    %cst_13 = arith.constant dense<0.000000e+00> : vector<2x8x32xf32>
    %23 = tpu.matmul %22, %3, %cst_13 {dimension_numbers = #tpu.dot_dimension_numbers<[2], [1], [1], [2], [0, 0, 0, 1, 1, 2], [0], [0]>} : vector<2x8x8xbf16>, vector<2x8x32xbf16>, vector<2x8x32xf32> -> vector<2x8x32xf32>
    "tpu.trace_stop"() : () -> ()
    %24 = arith.truncf %23 : vector<2x8x32xf32> to vector<2x8x32xbf16>
    %c0_14 = arith.constant 0 : index
    %c0_15 = arith.constant 0 : index
    %25 = vector.load %arg8[%c0_14, %c0_15] : memref<32x32xbf16, #tpu.memory_space<vmem>>, vector<32x32xbf16>
    "tpu.trace_start"() <{level = 10 : i32, message = "bqh,ho->bqo"}> : () -> ()
    %cst_16 = arith.constant dense<0.000000e+00> : vector<2x8x32xf32>
    %26 = tpu.matmul %24, %25, %cst_16 {dimension_numbers = #tpu.dot_dimension_numbers<[2], [0], [0, 1], [1], [0, 0, 0, 1, 1, 1], [], []>} : vector<2x8x32xbf16>, vector<32x32xbf16>, vector<2x8x32xf32> -> vector<2x8x32xf32>
    "tpu.trace_stop"() : () -> ()
    %c0_17 = arith.constant 0 : index
    %c0_18 = arith.constant 0 : index
    %27 = vector.load %arg9[%c0_17, %c0_18] : memref<1x32xf32, #tpu.memory_space<vmem>>, vector<1x32xf32>
    %28 = vector.shape_cast %27 : vector<1x32xf32> to vector<1x1x32xf32>
    %29 = vector.broadcast %28 : vector<1x1x32xf32> to vector<2x8x32xf32>
    %30 = arith.addf %26, %29 : vector<2x8x32xf32>
    %c0_19 = arith.constant 0 : index
    %c0_20 = arith.constant 0 : index
    %c0_21 = arith.constant 0 : index
    %31 = vector.load %arg10[%c0_19, %c0_20, %c0_21] : memref<2x8x32xf32, #tpu.memory_space<vmem>>, vector<2x8x32xf32>
    tpu.vector_store %arg10[%c0_19, %c0_20, %c0_21], %30 {strides = array<i32>} : memref<2x8x32xf32, #tpu.memory_space<vmem>>, vector<2x8x32xf32>,
    %c0_22 = arith.constant 0 : index
    %c0_23 = arith.constant 0 : index
    %c0_24 = arith.constant 0 : index
    %32 = vector.load %arg11[%c0_22, %c0_23, %c0_24] : memref<2x8x8xf32, #tpu.memory_space<vmem>>, vector<2x8x8xf32>
    tpu.vector_store %arg11[%c0_22, %c0_23, %c0_24], %21 {strides = array<i32>} : memref<2x8x8xf32, #tpu.memory_space<vmem>>, vector<2x8x8xf32>,
    return
  }
  func.func @transform_0(%arg0: i32, %arg1: i32) -> (i32, i32, i32) {
    %c0_i32 = arith.constant 0 : i32
    %c0_i32_0 = arith.constant 0 : i32
    %c0_i32_1 = arith.constant 0 : i32
    return %arg0, %c0_i32, %c0_i32_0 : i32, i32, i32
  }
  func.func @transform_1(%arg0: i32, %arg1: i32) -> (i32, i32, i32) {
    %c0_i32 = arith.constant 0 : i32
    %c0_i32_0 = arith.constant 0 : i32
    return %arg0, %arg1, %c0_i32 : i32, i32, i32
  }
  func.func @transform_2(%arg0: i32, %arg1: i32) -> (i32, i32) {
    %c0_i32 = arith.constant 0 : i32
    %c0_i32_0 = arith.constant 0 : i32
    %c0_i32_1 = arith.constant 0 : i32
    return %c0_i32, %c0_i32_0 : i32, i32
  }
  func.func @transform_3(%arg0: i32, %arg1: i32) -> (i32, i32) {
    %c0_i32 = arith.constant 0 : i32
    %c0_i32_0 = arith.constant 0 : i32
    %c0_i32_1 = arith.constant 0 : i32
    return %c0_i32, %c0_i32_0 : i32, i32
  }
  func.func @transform_4(%arg0: i32, %arg1: i32) -> (i32, i32) {
    %c0_i32 = arith.constant 0 : i32
    %c0_i32_0 = arith.constant 0 : i32
    %c0_i32_1 = arith.constant 0 : i32
    return %c0_i32, %c0_i32_0 : i32, i32
  }
  func.func @transform_5(%arg0: i32, %arg1: i32) -> (i32, i32) {
    %c0_i32 = arith.constant 0 : i32
    %c0_i32_0 = arith.constant 0 : i32
    %c0_i32_1 = arith.constant 0 : i32
    return %c0_i32, %c0_i32_0 : i32, i32
  }
  func.func @transform_6(%arg0: i32, %arg1: i32) -> (i32, i32) {
    %c0_i32 = arith.constant 0 : i32
    %c0_i32_0 = arith.constant 0 : i32
    %c0_i32_1 = arith.constant 0 : i32
    return %c0_i32, %c0_i32_0 : i32, i32
  }
  func.func @transform_7(%arg0: i32, %arg1: i32) -> (i32, i32) {
    %c0_i32 = arith.constant 0 : i32
    %c0_i32_0 = arith.constant 0 : i32
    %c0_i32_1 = arith.constant 0 : i32
    return %c0_i32, %c0_i32_0 : i32, i32
  }
  func.func @transform_8(%arg0: i32, %arg1: i32) -> (i32, i32, i32) {
    %c0_i32 = arith.constant 0 : i32
    %c0_i32_0 = arith.constant 0 : i32
    return %arg0, %arg1, %c0_i32 : i32, i32, i32
  }
  func.func @transform_9(%arg0: i32, %arg1: i32) -> (i32, i32, i32) {
    %c0_i32 = arith.constant 0 : i32
    %c0_i32_0 = arith.constant 0 : i32
    return %arg0, %arg1, %c0_i32 : i32, i32, i32
  }
}

</mosaic_0001>

<llo_original>
// kernel: attention_forward.1
$region0: #{attention_forward.1}
  #allocation0 [shape = 'u32[]', space=smem, size = 0x4, offset = 0x4, fixed_abs, tag = 'smem constant byte address 0x4 - core index']
  #allocation1 [shape = 'u32[144,128]{1,0:T(1,128)}', space=vmem, size = 0x12000, scoped, tag = 'internal scratch']
  #allocation2 [shape = 'bf16[2,8,32]{2,1,0:T(8,128)(2,1)}', space=vmem, size = 0x1000, scoped, tag = 'scratch operand']
  %s0 = inlined_call_operand.vmem [shape: bf16[2,8,32], index: 0, kind: input, shape index: {}]
  %s1 = inlined_call_operand.vmem [shape: bf16[2,8,32], index: 1, kind: input, shape index: {}]
  %s2 = inlined_call_operand.vmem [shape: bf16[32,32], index: 2, kind: input, shape index: {}]
  %s3 = inlined_call_operand.vmem [shape: f32[1,32], index: 3, kind: input, shape index: {}]
  %s4 = inlined_call_operand.vmem [shape: bf16[32,32], index: 4, kind: input, shape index: {}]
  %s5 = inlined_call_operand.vmem [shape: f32[1,32], index: 5, kind: input, shape index: {}]
  %s6 = inlined_call_operand.vmem [shape: bf16[32,32], index: 6, kind: input, shape index: {}]
  %s7 = inlined_call_operand.vmem [shape: f32[1,32], index: 7, kind: input, shape index: {}]
  %s8 = inlined_call_operand.hbm [shape: f32[2,8,32], index: 8, kind: output, shape index: {0}]
  %s9 = inlined_call_operand.hbm [shape: f32[2,8,8], index: 9, kind: output, shape index: {1}]
  %10 = xla_tuple %s8, %s9
  %s11 = sld [smem:[#allocation0]]
  $region54: #{attention_forward.1} parent=0
    _
  %s13 = ssub.s32 1, %s11
  %s14 = scalar_select 0, %s13, %s11
  $region1: #{attention_forward.1} parent=0
    #allocation3 [shape = 'u8[8192]{0}', space=vmem, size = 0x2000, scoped, tag = 'output window, operand 0, single buffered']
    #allocation4 [shape = 's32[1]{0}', space=sflag, size = 0x4, scoped, tag = 'scoped memory for attention_forward.1']
    #allocation5 [shape = 'u8[8192]{0}', space=vmem, size = 0x2000, scoped, tag = 'output window, operand 1, single buffered']
    #allocation6 [shape = 's32[1]{0}', space=sflag, size = 0x4, scoped, tag = 'scoped memory for attention_forward.1']
    %15 = vsyncpa [#allocation4], 0
    %16 = vsyncpa [#allocation6], 0
    // Predicated region
    $region2: #{attention_forward.1} parent=1 // pred_check
      _
    $region3: #{attention_forward.1} parent=1 // pred_check_branch
      %18 = sbr.rel (0) target = $region5
    $region4: #{attention_forward.1} parent=1 // pred_region
      _
    $region5: #{attention_forward.1} parent=1 // pred_fallthru
      _
    // Predicated region
    $region6: #{attention_forward.1} parent=1 // pred_check
      _
    $region7: #{attention_forward.1} parent=1 // pred_check_branch
      %20 = sbr.rel (0) target = $region9
    $region8: #{attention_forward.1} parent=1 // pred_region
      _
    $region9: #{attention_forward.1} parent=1 // pred_fallthru
      _
    // Predicated region
    $region10: #{attention_forward.1} parent=1 // pred_check
      _
    $region11: #{attention_forward.1} parent=1 // pred_check_branch
      %22 = sbr.rel (0) target = $region13
    $region12: #{attention_forward.1} parent=1 // pred_region
      _
    $region13: #{attention_forward.1} parent=1 // pred_fallthru
      _
    // Predicated region
    $region14: #{attention_forward.1} parent=1 // pred_check
      _
    $region15: #{attention_forward.1} parent=1 // pred_check_branch
      %24 = sbr.rel (0) target = $region17
    $region16: #{attention_forward.1} parent=1 // pred_region
      _
    $region17: #{attention_forward.1} parent=1 // pred_fallthru
      _
    // Predicated region
    $region18: #{attention_forward.1} parent=1 // pred_check
      _
    $region19: #{attention_forward.1} parent=1 // pred_check_branch
      %26 = sbr.rel (0) target = $region21
    $region20: #{attention_forward.1} parent=1 // pred_region
      _
    $region21: #{attention_forward.1} parent=1 // pred_fallthru
      _
    // Predicated region
    $region22: #{attention_forward.1} parent=1 // pred_check
      _
    $region23: #{attention_forward.1} parent=1 // pred_check_branch
      %28 = sbr.rel (0) target = $region25
    $region24: #{attention_forward.1} parent=1 // pred_region
      _
    $region25: #{attention_forward.1} parent=1 // pred_fallthru
      _
    // Predicated region
    $region26: #{attention_forward.1} parent=1 // pred_check
      _
    $region27: #{attention_forward.1} parent=1 // pred_check_branch
      %30 = sbr.rel (0) target = $region29
    $region28: #{attention_forward.1} parent=1 // pred_region
      _
    $region29: #{attention_forward.1} parent=1 // pred_fallthru
      _
    // Predicated region
    $region30: #{attention_forward.1} parent=1 // pred_check
      _
    $region31: #{attention_forward.1} parent=1 // pred_check_branch
      %32 = sbr.rel (0) target = $region33
    $region32: #{attention_forward.1} parent=1 // pred_region
      _
    $region33: #{attention_forward.1} parent=1 // pred_fallthru
      _
    %p34 = scmp.eq.s32.totalorder 0, 0
    // Predicated region
    $region34: #{attention_forward.1} parent=1 // pred_check
      %p35 = pneg %p34
    $region35: #{attention_forward.1} parent=1 // pred_check_branch
      %37 = sbr.rel (%p35) target = $region37
    $region36: #{attention_forward.1} parent=1 // pred_region
      %v38 = vld [vmem:[%s0] sm:$0xf]
      %v39 = vld [vmem:[%s0 + $0x4] sm:$0xf]
      %v40 = vld [vmem:[%s2] sm:$0xf]
      %v41 = vld [vmem:[%s2 + $0x4] sm:$0xf]
      %v42 = vld [vmem:[%s2 + $0x8] sm:$0xf]
      %v43 = vld [vmem:[%s2 + $0xc] sm:$0xf]
      %v44 = vld [vmem:[%s3] sm:$0x1]
      %v46 = vlaneseq
      %v47 = vshrl.u32 %v46, 7
      %v48 = vsub.s32 0, %v47
      %v49 = vrot.slane %v44, %v48
      %v53 = vunpack.c.l.b16 %v38
      %v54 = vunpack.c.l.b16 %v39
      %v55 = vpack.c.b16 %v54, %v53
      %v60 = vunpack.c.l.b16 %v40
      %v61 = vunpack.c.l.b16 %v41
      %v62 = vunpack.c.l.b16 %v42
      %v63 = vunpack.c.l.b16 %v43
      %v64 = vpack.c.b16 %v61, %v60
      %v65 = vpack.c.b16 %v63, %v62
      %vm68 = vcmask 261120
      %v70 = vsel %vm68, %v55, 0
      %72 = vmatprep.subr.bf16.mxu0 0
      %73 = vmatpush1.bf16.msra.mxu0 %v64
      %74 = vmatprep.subr.bf16.mxu0 0
      %75 = vmatpush1.bf16.msra.mxu0 %v65
      %76 = vmatprep.subr.bf16.mxu0 0
      %77 = vmatpush1.bf16.msra.mxu0 0
      %78 = vmatprep.subr.bf16.mxu0 0
      %79 = vmatpush1.bf16.msra.mxu0 0
      %80 = vmatprep.subr.bf16.mxu0 0
      %81 = vmatpush1.bf16.msra.mxu0 0
      %82 = vmatprep.subr.bf16.mxu0 0
      %83 = vmatpush1.bf16.msra.mxu0 0
      %84 = vmatprep.subr.bf16.mxu0 0
      %85 = vmatpush1.bf16.msra.mxu0 0
      %86 = vmatprep.subr.bf16.mxu0 0
      %87 = vmatpush1.bf16.msra.mxu0 0
      %88 = vmatprep.subr.bf16.mxu0 0
      %89 = vmatpush1.bf16.msra.mxu0 0
      %90 = vmatprep.subr.bf16.mxu0 0
      %91 = vmatpush1.bf16.msra.mxu0 0
      %92 = vmatprep.subr.bf16.mxu0 0
      %93 = vmatpush1.bf16.msra.mxu0 0
      %94 = vmatprep.subr.bf16.mxu0 0
      %95 = vmatpush1.bf16.msra.mxu0 0
      %96 = vmatprep.subr.bf16.mxu0 0
      %97 = vmatpush1.bf16.msra.mxu0 0
      %98 = vmatprep.subr.bf16.mxu0 0
      %99 = vmatpush1.bf16.msra.mxu0 0
      %100 = vmatprep.subr.bf16.mxu0 0
      %101 = vmatpush1.bf16.msra.mxu0 0
      %102 = vmatprep.subr.bf16.mxu0 0
      %103 = vmatpush1.bf16.msra.mxu0 0
      %104 = vmatprep.mubr.bf16.mxu0 0
      %105 = vmatmul.mubr.bf16.gmra.mrb[0].mxu0 %v70
      %v106 = vpop.f32.mrb[0].mxu0
      %v107 = vadd.f32 %v49, %v106
      %v108 = vpop.f32.mrb[0].mxu0
      %v109 = vpop.f32.mrb[0].mxu0
      %v110 = vadd.f32 %v49, %v109
      %v111 = vpop.f32.mrb[0].mxu0
      %112 = vdwg.mxu0
      %v113 = vpack.c.bf16 %v107, %v107
      %v114 = vpack.c.bf16 %v110, %v110
      %vm115 = vcmask 257024
      %116 = vst.msk [vmem:[#allocation2] sm:$0xf] %vm115, %v113
      %117 = vst.msk [vmem:[#allocation2 + $0x4] sm:$0xf] %vm115, %v114
    $region37: #{attention_forward.1} parent=1 // pred_fallthru
      _
    %v118 = vld [vmem:[#allocation2] sm:$0xf]
    %v119 = vld [vmem:[#allocation2 + $0x4] sm:$0xf]
    %v120 = vld [vmem:[%s1] sm:$0xf]
    %v121 = vld [vmem:[%s1 + $0x4] sm:$0xf]
    %v122 = vld [vmem:[%s4] sm:$0xf]
    %v123 = vld [vmem:[%s4 + $0x4] sm:$0xf]
    %v124 = vld [vmem:[%s4 + $0x8] sm:$0xf]
    %v125 = vld [vmem:[%s4 + $0xc] sm:$0xf]
    %v126 = vld [vmem:[%s5] sm:$0x1]
    %v128 = vlaneseq
    %v129 = vshrl.u32 %v128, 7
    %v130 = vsub.s32 0, %v129
    %v131 = vrot.slane %v126, %v130
    %v135 = vunpack.c.l.b16 %v120
    %v136 = vunpack.c.l.b16 %v121
    %v137 = vpack.c.b16 %v136, %v135
    %v142 = vunpack.c.l.b16 %v122
    %v143 = vunpack.c.l.b16 %v123
    %v144 = vunpack.c.l.b16 %v124
    %v145 = vunpack.c.l.b16 %v125
    %v146 = vpack.c.b16 %v143, %v142
    %v147 = vpack.c.b16 %v145, %v144
    %vm150 = vcmask 261120
    %v152 = vsel %vm150, %v137, 0
    %154 = vmatprep.subr.bf16.mxu0 0
    %155 = vmatpush1.bf16.msra.mxu0 %v146
    %156 = vmatprep.subr.bf16.mxu0 0
    %157 = vmatpush1.bf16.msra.mxu0 %v147
    %158 = vmatprep.subr.bf16.mxu0 0
    %159 = vmatpush1.bf16.msra.mxu0 0
    %160 = vmatprep.subr.bf16.mxu0 0
    %161 = vmatpush1.bf16.msra.mxu0 0
    %162 = vmatprep.subr.bf16.mxu0 0
    %163 = vmatpush1.bf16.msra.mxu0 0
    %164 = vmatprep.subr.bf16.mxu0 0
    %165 = vmatpush1.bf16.msra.mxu0 0
    %166 = vmatprep.subr.bf16.mxu0 0
    %167 = vmatpush1.bf16.msra.mxu0 0
    %168 = vmatprep.subr.bf16.mxu0 0
    %169 = vmatpush1.bf16.msra.mxu0 0
    %170 = vmatprep.subr.bf16.mxu0 0
    %171 = vmatpush1.bf16.msra.mxu0 0
    %172 = vmatprep.subr.bf16.mxu0 0
    %173 = vmatpush1.bf16.msra.mxu0 0
    %174 = vmatprep.subr.bf16.mxu0 0
    %175 = vmatpush1.bf16.msra.mxu0 0
    %176 = vmatprep.subr.bf16.mxu0 0
    %177 = vmatpush1.bf16.msra.mxu0 0
    %178 = vmatprep.subr.bf16.mxu0 0
    %179 = vmatpush1.bf16.msra.mxu0 0
    %180 = vmatprep.subr.bf16.mxu0 0
    %181 = vmatpush1.bf16.msra.mxu0 0
    %182 = vmatprep.subr.bf16.mxu0 0
    %183 = vmatpush1.bf16.msra.mxu0 0
    %184 = vmatprep.subr.bf16.mxu0 0
    %185 = vmatpush1.bf16.msra.mxu0 0
    %186 = vmatprep.mubr.bf16.mxu0 0
    %187 = vmatmul.mubr.bf16.gmra.mrb[0].mxu0 %v152
    %v188 = vpop.f32.mrb[0].mxu0
    %v189 = vadd.f32 %v131, %v188
    %v190 = vpop.f32.mrb[0].mxu0
    %v191 = vpop.f32.mrb[0].mxu0
    %v192 = vadd.f32 %v131, %v191
    %v193 = vpop.f32.mrb[0].mxu0
    %194 = vdwg.mxu0
    %v195 = vpack.c.bf16 %v189, %v189
    %v196 = vpack.c.bf16 %v192, %v192
    %v198 = vsel %vm150, %v195, 0
    %v201 = vsel %vm150, %v118, 0
    %203 = vmatprep.subr.bf16.mxu0 0
    %204 = vmatpush1.bf16.xpose.msra.mxu0 %v201
    %205 = vmatprep.subr.bf16.mxu0 0
    %206 = vmatpush1.bf16.xpose.msra.mxu0 0
    %207 = vmatprep.subr.bf16.mxu0 0
    %208 = vmatpush1.bf16.xpose.msra.mxu0 0
    %209 = vmatprep.subr.bf16.mxu0 0
    %210 = vmatpush1.bf16.xpose.msra.mxu0 0
    %211 = vmatprep.subr.bf16.mxu0 0
    %212 = vmatpush1.bf16.xpose.msra.mxu0 0
    %213 = vmatprep.subr.bf16.mxu0 0
    %214 = vmatpush1.bf16.xpose.msra.mxu0 0
    %215 = vmatprep.subr.bf16.mxu0 0
    %216 = vmatpush1.bf16.xpose.msra.mxu0 0
    %217 = vmatprep.subr.bf16.mxu0 0
    %218 = vmatpush1.bf16.xpose.msra.mxu0 0
    %219 = vmatprep.subr.bf16.mxu0 0
    %220 = vmatpush1.bf16.xpose.msra.mxu0 0
    %221 = vmatprep.subr.bf16.mxu0 0
    %222 = vmatpush1.bf16.xpose.msra.mxu0 0
    %223 = vmatprep.subr.bf16.mxu0 0
    %224 = vmatpush1.bf16.xpose.msra.mxu0 0
    %225 = vmatprep.subr.bf16.mxu0 0
    %226 = vmatpush1.bf16.xpose.msra.mxu0 0
    %227 = vmatprep.subr.bf16.mxu0 0
    %228 = vmatpush1.bf16.xpose.msra.mxu0 0
    %229 = vmatprep.subr.bf16.mxu0 0
    %230 = vmatpush1.bf16.xpose.msra.mxu0 0
    %231 = vmatprep.subr.bf16.mxu0 0
    %232 = vmatpush1.bf16.xpose.msra.mxu0 0
    %233 = vmatprep.subr.bf16.mxu0 0
    %234 = vmatpush1.bf16.xpose.msra.mxu0 0
    %235 = vmatprep.mubr.bf16.mxu0 0
    %236 = vmatmul.mubr.bf16.gmra.mrb[0].mxu0 %v198
    %v237 = vpop.f32.mrb[0].mxu0
    %v238 = vadd.f32 0.0, %v237
    %v239 = vpop.f32.mrb[0].mxu0
    %v240 = vpop.f32.mrb[0].mxu0
    %v241 = vpop.f32.mrb[0].mxu0
    %242 = vdwg.mxu0
    %v244 = vsel %vm150, %v196, 0
    %v247 = vsel %vm150, %v119, 0
    %249 = vmatprep.subr.bf16.mxu0 0
    %250 = vmatpush1.bf16.xpose.msra.mxu0 %v247
    %251 = vmatprep.subr.bf16.mxu0 0
    %252 = vmatpush1.bf16.xpose.msra.mxu0 0
    %253 = vmatprep.subr.bf16.mxu0 0
    %254 = vmatpush1.bf16.xpose.msra.mxu0 0
    %255 = vmatprep.subr.bf16.mxu0 0
    %256 = vmatpush1.bf16.xpose.msra.mxu0 0
    %257 = vmatprep.subr.bf16.mxu0 0
    %258 = vmatpush1.bf16.xpose.msra.mxu0 0
    %259 = vmatprep.subr.bf16.mxu0 0
    %260 = vmatpush1.bf16.xpose.msra.mxu0 0
    %261 = vmatprep.subr.bf16.mxu0 0
    %262 = vmatpush1.bf16.xpose.msra.mxu0 0
    %263 = vmatprep.subr.bf16.mxu0 0
    %264 = vmatpush1.bf16.xpose.msra.mxu0 0
    %265 = vmatprep.subr.bf16.mxu0 0
    %266 = vmatpush1.bf16.xpose.msra.mxu0 0
    %267 = vmatprep.subr.bf16.mxu0 0
    %268 = vmatpush1.bf16.xpose.msra.mxu0 0
    %269 = vmatprep.subr.bf16.mxu0 0
    %270 = vmatpush1.bf16.xpose.msra.mxu0 0
    %271 = vmatprep.subr.bf16.mxu0 0
    %272 = vmatpush1.bf16.xpose.msra.mxu0 0
    %273 = vmatprep.subr.bf16.mxu0 0
    %274 = vmatpush1.bf16.xpose.msra.mxu0 0
    %275 = vmatprep.subr.bf16.mxu0 0
    %276 = vmatpush1.bf16.xpose.msra.mxu0 0
    %277 = vmatprep.subr.bf16.mxu0 0
    %278 = vmatpush1.bf16.xpose.msra.mxu0 0
    %279 = vmatprep.subr.bf16.mxu0 0
    %280 = vmatpush1.bf16.xpose.msra.mxu0 0
    %281 = vmatprep.mubr.bf16.mxu0 0
    %282 = vmatmul.mubr.bf16.gmra.mrb[0].mxu0 %v244
    %v283 = vpop.f32.mrb[0].mxu0
    %v284 = vadd.f32 0.0, %v283
    %v285 = vpop.f32.mrb[0].mxu0
    %v286 = vpop.f32.mrb[0].mxu0
    %v287 = vpop.f32.mrb[0].mxu0
    %288 = vdwg.mxu0
    %vm289 = vcmask 64512
    %v290 = vsel %vm289, %v238, -inf
    %291 = vmax.xlane.f32.xlu0 %v290
    %v292 = vpop.xlane.xlu0 %291
    %v293 = vsel %vm289, %v284, -inf
    %294 = vmax.xlane.f32.xlu0 %v293
    %v295 = vpop.xlane.xlu0 %294
    %v296 = vsub.f32 %v238, %v292
    %v297 = vsub.f32 %v284, %v295
    %v298 = vmul.f32 %v296, 1.442695
    %v299 = vpow.pop %v298
    %v300 = vmul.f32 %v297, 1.442695
    %v301 = vpow.pop %v300
    %v302 = vsel %vm289, %v299, 0.0
    %303 = vadd.xlane.f32.xlu0 %v302
    %v304 = vpop.xlane.xlu0 %303
    %v305 = vsel %vm289, %v301, 0.0
    %306 = vadd.xlane.f32.xlu0 %v305
    %v307 = vpop.xlane.xlu0 %306
    %v308 = vrcp.pop %v304
    %v309 = vmul.f32 %v299, %v308
    %v310 = vrcp.pop %v307
    %v311 = vmul.f32 %v301, %v310
    %v312 = vpack.c.bf16 %v309, %v309
    %v313 = vpack.c.bf16 %v311, %v311
    %v315 = vsel %vm289, %v312, 0
    %vm317 = vcmask 1043456
    %v318 = vsel %vm317, %v118, 0
    %320 = vmatprep.subr.bf16.mxu0 0
    %321 = vmatpush1.bf16.msra.mxu0 %v318
    %322 = vmatprep.subr.bf16.mxu0 0
    %323 = vmatpush1.bf16.msra.mxu0 0
    %324 = vmatprep.subr.bf16.mxu0 0
    %325 = vmatpush1.bf16.msra.mxu0 0
    %326 = vmatprep.subr.bf16.mxu0 0
    %327 = vmatpush1.bf16.msra.mxu0 0
    %328 = vmatprep.subr.bf16.mxu0 0
    %329 = vmatpush1.bf16.msra.mxu0 0
    %330 = vmatprep.subr.bf16.mxu0 0
    %331 = vmatpush1.bf16.msra.mxu0 0
    %332 = vmatprep.subr.bf16.mxu0 0
    %333 = vmatpush1.bf16.msra.mxu0 0
    %334 = vmatprep.subr.bf16.mxu0 0
    %335 = vmatpush1.bf16.msra.mxu0 0
    %336 = vmatprep.subr.bf16.mxu0 0
    %337 = vmatpush1.bf16.msra.mxu0 0
    %338 = vmatprep.subr.bf16.mxu0 0
    %339 = vmatpush1.bf16.msra.mxu0 0
    %340 = vmatprep.subr.bf16.mxu0 0
    %341 = vmatpush1.bf16.msra.mxu0 0
    %342 = vmatprep.subr.bf16.mxu0 0
    %343 = vmatpush1.bf16.msra.mxu0 0
    %344 = vmatprep.subr.bf16.mxu0 0
    %345 = vmatpush1.bf16.msra.mxu0 0
    %346 = vmatprep.subr.bf16.mxu0 0
    %347 = vmatpush1.bf16.msra.mxu0 0
    %348 = vmatprep.subr.bf16.mxu0 0
    %349 = vmatpush1.bf16.msra.mxu0 0
    %350 = vmatprep.subr.bf16.mxu0 0
    %351 = vmatpush1.bf16.msra.mxu0 0
    %352 = vmatprep.mubr.bf16.mxu0 0
    %353 = vmatmul.mubr.bf16.gmra.mrb[0].mxu0 %v315
    %v354 = vpop.f32.mrb[0].mxu0
    %v355 = vadd.f32 0.0, %v354
    %v356 = vpop.f32.mrb[0].mxu0
    %v357 = vpop.f32.mrb[0].mxu0
    %v358 = vpop.f32.mrb[0].mxu0
    %359 = vdwg.mxu0
    %v361 = vsel %vm289, %v313, 0
    %v363 = vsel %vm317, %v119, 0
    %365 = vmatprep.subr.bf16.mxu0 0
    %366 = vmatpush1.bf16.msra.mxu0 %v363
    %367 = vmatprep.subr.bf16.mxu0 0
    %368 = vmatpush1.bf16.msra.mxu0 0
    %369 = vmatprep.subr.bf16.mxu0 0
    %370 = vmatpush1.bf16.msra.mxu0 0
    %371 = vmatprep.subr.bf16.mxu0 0
    %372 = vmatpush1.bf16.msra.mxu0 0
    %373 = vmatprep.subr.bf16.mxu0 0
    %374 = vmatpush1.bf16.msra.mxu0 0
    %375 = vmatprep.subr.bf16.mxu0 0
    %376 = vmatpush1.bf16.msra.mxu0 0
    %377 = vmatprep.subr.bf16.mxu0 0
    %378 = vmatpush1.bf16.msra.mxu0 0
    %379 = vmatprep.subr.bf16.mxu0 0
    %380 = vmatpush1.bf16.msra.mxu0 0
    %381 = vmatprep.subr.bf16.mxu0 0
    %382 = vmatpush1.bf16.msra.mxu0 0
    %383 = vmatprep.subr.bf16.mxu0 0
    %384 = vmatpush1.bf16.msra.mxu0 0
    %385 = vmatprep.subr.bf16.mxu0 0
    %386 = vmatpush1.bf16.msra.mxu0 0
    %387 = vmatprep.subr.bf16.mxu0 0
    %388 = vmatpush1.bf16.msra.mxu0 0
    %389 = vmatprep.subr.bf16.mxu0 0
    %390 = vmatpush1.bf16.msra.mxu0 0
    %391 = vmatprep.subr.bf16.mxu0 0
    %392 = vmatpush1.bf16.msra.mxu0 0
    %393 = vmatprep.subr.bf16.mxu0 0
    %394 = vmatpush1.bf16.msra.mxu0 0
    %395 = vmatprep.subr.bf16.mxu0 0
    %396 = vmatpush1.bf16.msra.mxu0 0
    %397 = vmatprep.mubr.bf16.mxu0 0
    %398 = vmatmul.mubr.bf16.gmra.mrb[0].mxu0 %v361
    %v399 = vpop.f32.mrb[0].mxu0
    %v400 = vadd.f32 0.0, %v399
    %v401 = vpop.f32.mrb[0].mxu0
    %v402 = vpop.f32.mrb[0].mxu0
    %v403 = vpop.f32.mrb[0].mxu0
    %404 = vdwg.mxu0
    %v405 = vpack.c.bf16 %v355, %v355
    %v406 = vpack.c.bf16 %v400, %v400
    %v407 = vld [vmem:[%s6] sm:$0xf]
    %v408 = vld [vmem:[%s6 + $0x4] sm:$0xf]
    %v409 = vld [vmem:[%s6 + $0x8] sm:$0xf]
    %v410 = vld [vmem:[%s6 + $0xc] sm:$0xf]
    %v411 = vld [vmem:[%s7] sm:$0x1]
    %v413 = vlaneseq
    %v414 = vshrl.u32 %v413, 7
    %v415 = vsub.s32 0, %v414
    %v416 = vrot.slane %v411, %v415
    %v420 = vunpack.c.l.b16 %v405
    %v421 = vunpack.c.l.b16 %v406
    %v422 = vpack.c.b16 %v421, %v420
    %v427 = vunpack.c.l.b16 %v407
    %v428 = vunpack.c.l.b16 %v408
    %v429 = vunpack.c.l.b16 %v409
    %v430 = vunpack.c.l.b16 %v410
    %v431 = vpack.c.b16 %v428, %v427
    %v432 = vpack.c.b16 %v430, %v429
    %v436 = vsel %vm150, %v422, 0
    %438 = vmatprep.subr.bf16.mxu0 0
    %439 = vmatpush1.bf16.msra.mxu0 %v431
    %440 = vmatprep.subr.bf16.mxu0 0
    %441 = vmatpush1.bf16.msra.mxu0 %v432
    %442 = vmatprep.subr.bf16.mxu0 0
    %443 = vmatpush1.bf16.msra.mxu0 0
    %444 = vmatprep.subr.bf16.mxu0 0
    %445 = vmatpush1.bf16.msra.mxu0 0
    %446 = vmatprep.subr.bf16.mxu0 0
    %447 = vmatpush1.bf16.msra.mxu0 0
    %448 = vmatprep.subr.bf16.mxu0 0
    %449 = vmatpush1.bf16.msra.mxu0 0
    %450 = vmatprep.subr.bf16.mxu0 0
    %451 = vmatpush1.bf16.msra.mxu0 0
    %452 = vmatprep.subr.bf16.mxu0 0
    %453 = vmatpush1.bf16.msra.mxu0 0
    %454 = vmatprep.subr.bf16.mxu0 0
    %455 = vmatpush1.bf16.msra.mxu0 0
    %456 = vmatprep.subr.bf16.mxu0 0
    %457 = vmatpush1.bf16.msra.mxu0 0
    %458 = vmatprep.subr.bf16.mxu0 0
    %459 = vmatpush1.bf16.msra.mxu0 0
    %460 = vmatprep.subr.bf16.mxu0 0
    %461 = vmatpush1.bf16.msra.mxu0 0
    %462 = vmatprep.subr.bf16.mxu0 0
    %463 = vmatpush1.bf16.msra.mxu0 0
    %464 = vmatprep.subr.bf16.mxu0 0
    %465 = vmatpush1.bf16.msra.mxu0 0
    %466 = vmatprep.subr.bf16.mxu0 0
    %467 = vmatpush1.bf16.msra.mxu0 0
    %468 = vmatprep.subr.bf16.mxu0 0
    %469 = vmatpush1.bf16.msra.mxu0 0
    %470 = vmatprep.mubr.bf16.mxu0 0
    %471 = vmatmul.mubr.bf16.gmra.mrb[0].mxu0 %v436
    %v472 = vpop.f32.mrb[0].mxu0
    %v473 = vadd.f32 %v416, %v472
    %v474 = vpop.f32.mrb[0].mxu0
    %v475 = vpop.f32.mrb[0].mxu0
    %v476 = vadd.f32 %v416, %v475
    %v477 = vpop.f32.mrb[0].mxu0
    %478 = vdwg.mxu0
    %479 = vst.msk [vmem:[#allocation3] sm:$0xff] %vm150, %v473
    %480 = vst.msk [vmem:[#allocation3 + $0x8] sm:$0xff] %vm150, %v476
    %481 = vst.msk [vmem:[#allocation5] sm:$0xff] %vm289, %v309
    %482 = vst.msk [vmem:[#allocation5 + $0x8] sm:$0xff] %vm289, %v311
    // Predicated region
    $region38: #{attention_forward.1} parent=1 // pred_check
      _
    $region39: #{attention_forward.1} parent=1 // pred_check_branch
      %484 = sbr.rel (0) target = $region41
    $region40: #{attention_forward.1} parent=1 // pred_region
      %s486 = ssub.s32 256, 256
      %487 = vsyncadd [#allocation4], %s486
      %s488 = sshll.u32 [#allocation3], 4
      %s489 = int_to_ptr.vmem [resolvable:$true] %s488
      %494 = dma.vmem_to_hbm [thread:$0]  %s489, 256, %s8, [#allocation4], 128, 128, 8
    $region41: #{attention_forward.1} parent=1 // pred_fallthru
      _
    // Predicated region
    $region42: #{attention_forward.1} parent=1 // pred_check
      _
    $region43: #{attention_forward.1} parent=1 // pred_check_branch
      %496 = sbr.rel (0) target = $region45
    $region44: #{attention_forward.1} parent=1 // pred_region
      %s498 = ssub.s32 256, 256
      %499 = vsyncadd [#allocation6], %s498
      %s500 = sshll.u32 [#allocation5], 4
      %s501 = int_to_ptr.vmem [resolvable:$true] %s500
      %506 = dma.vmem_to_hbm [thread:$0]  %s501, 256, %s9, [#allocation6], 128, 128, 8
    $region45: #{attention_forward.1} parent=1 // pred_fallthru
      _
    // Predicated region
    $region46: #{attention_forward.1} parent=1 // pred_check
      _
    $region47: #{attention_forward.1} parent=1 // pred_check_branch
      %508 = sbr.rel (0) target = $region49
    $region48: #{attention_forward.1} parent=1 // pred_region
      %509 = dma.done [#allocation4], 256
    $region49: #{attention_forward.1} parent=1 // pred_fallthru
      _
    // Predicated region
    $region50: #{attention_forward.1} parent=1 // pred_check
      _
    $region51: #{attention_forward.1} parent=1 // pred_check_branch
      %511 = sbr.rel (0) target = $region53
    $region52: #{attention_forward.1} parent=1 // pred_region
      %512 = dma.done [#allocation6], 256
    $region53: #{attention_forward.1} parent=1 // pred_fallthru
      _
    %513 = vsyncpa [#allocation4], 1
    %514 = vsyncpa [#allocation6], 1

</llo_original>
